<compile_context>
chip_gen: v5e
topology: v5e:2x2
jax: 0.10.0
libtpu: 0.0.40
codegen_flags: <defaults>
</compile_context>

<pallas_src>
import jax
import jax.numpy as jnp
from jax.experimental import pallas as pl
from jax.experimental.pallas import tpu as pltpu  # noqa: F401  (kept for parity / future tuning)


def scale_mul_kernel(scale_ref, x_ref, o_ref):
    # scale_ref: (1, C, 1)  -- per-channel scale, broadcast along lanes (H*W)
    # x_ref    : (1, C, HW) -- one batch element's activations
    o_ref[...] = x_ref[...] * scale_ref[...]


def layer_scale_mul(x_nchw, scale):
    """Compute scale[..., None, None] * x_nchw with a Pallas kernel.

    x_nchw : (N, C, H, W) float32
    scale  : (C,), (C, 1, 1) or any shape reshapeable to (C,) float32
    """
    N, C, H, W = x_nchw.shape
    HW = H * W

    # Free reshapes (row-major contiguous), no HBM transpose passes.
    x_3d = x_nchw.reshape(N, C, HW)
    scale_3d = scale.reshape(1, C, 1)

    out_3d = pl.pallas_call(
        scale_mul_kernel,
        out_shape=jax.ShapeDtypeStruct((N, C, HW), x_nchw.dtype),
        grid=(N,),  # N == 1 for this module -> effectively a single block
        in_specs=[
            pl.BlockSpec((1, C, 1), lambda n: (0, 0, 0)),   # scale (shared)
            pl.BlockSpec((1, C, HW), lambda n: (n, 0, 0)),  # activations
        ],
        out_specs=pl.BlockSpec((1, C, HW), lambda n: (n, 0, 0)),
    )(scale_3d, x_3d)

    return out_3d.reshape(N, C, H, W)


if __name__ == "__main__":
    key = jax.random.PRNGKey(0)
    k_x, k_s = jax.random.split(key)

    # Shapes implied by the module: x219 is (1, 768, 7, 7), scale is (768, 1, 1).
    N, C, H, W = 1, 768, 7, 7
    x219 = jax.random.normal(k_x, (N, C, H, W), dtype=jnp.float32)
    # torch.rand -> uniform [0, 1)
    layer_scale17 = jax.random.uniform(k_s, (C, 1, 1), dtype=jnp.float32)

    out = layer_scale_mul(x219, layer_scale17)
    out = jax.block_until_ready(out)

    # Reference semantics: broadcasting (768,1,1) * (1,768,7,7) -> (1,768,7,7)
    ref = layer_scale17.reshape(1, C, 1, 1) * x219
    assert out.shape == (N, C, H, W)
    assert out.dtype == jnp.float32
    assert jnp.allclose(out, ref, atol=1e-6, rtol=1e-6)

    print("KERNEL_OK")
</pallas_src>

<mosaic_0001>
module attributes {stable_mosaic.version = 11 : i64} {
  func.func @scale_mul_kernel(%arg0: i32, %arg1: memref<1x768x1xf32, #tpu.memory_space<vmem>>, %arg2: memref<1x768x49xf32, #tpu.memory_space<vmem>>, %arg3: memref<1x768x49xf32, #tpu.memory_space<vmem>>) attributes {dimension_semantics = [#tpu.dimension_semantics<arbitrary>], iteration_bounds = array<i64: 1>, scalar_prefetch = 0 : i64, scratch_operands = 0 : i64, tpu.core_type = #tpu.core_type<tc>, window_params = [{pipeline_mode = #tpu.pipeline_mode<synchronous>, transform_indices = @transform_0, window_bounds = array<i64: 1, 768, 1>}, {transform_indices = @transform_1, window_bounds = array<i64: 1, 768, 49>}, {transform_indices = @transform_2, window_bounds = array<i64: 1, 768, 49>}]} {
    %c0 = arith.constant 0 : index
    %c0_0 = arith.constant 0 : index
    %c0_1 = arith.constant 0 : index
    %0 = vector.load %arg2[%c0, %c0_0, %c0_1] : memref<1x768x49xf32, #tpu.memory_space<vmem>>, vector<1x768x49xf32>
    %c0_2 = arith.constant 0 : index
    %c0_3 = arith.constant 0 : index
    %c0_4 = arith.constant 0 : index
    %1 = vector.load %arg1[%c0_2, %c0_3, %c0_4] : memref<1x768x1xf32, #tpu.memory_space<vmem>>, vector<1x768x1xf32>
    %2 = vector.broadcast %1 : vector<1x768x1xf32> to vector<1x768x49xf32>
    %3 = arith.mulf %0, %2 : vector<1x768x49xf32>
    %c0_5 = arith.constant 0 : index
    %c0_6 = arith.constant 0 : index
    %c0_7 = arith.constant 0 : index
    %4 = vector.load %arg3[%c0_5, %c0_6, %c0_7] : memref<1x768x49xf32, #tpu.memory_space<vmem>>, vector<1x768x49xf32>
    tpu.vector_store %arg3[%c0_5, %c0_6, %c0_7], %3 {strides = array<i32>} : memref<1x768x49xf32, #tpu.memory_space<vmem>>, vector<1x768x49xf32>,
    return
  }
  func.func @transform_0(%arg0: i32) -> (i32, i32, i32) {
    %c0_i32 = arith.constant 0 : i32
    %c0_i32_0 = arith.constant 0 : i32
    %c0_i32_1 = arith.constant 0 : i32
    %c0_i32_2 = arith.constant 0 : i32
    return %c0_i32, %c0_i32_0, %c0_i32_1 : i32, i32, i32
  }
  func.func @transform_1(%arg0: i32) -> (i32, i32, i32) {
    %c0_i32 = arith.constant 0 : i32
    %c0_i32_0 = arith.constant 0 : i32
    %c0_i32_1 = arith.constant 0 : i32
    return %arg0, %c0_i32, %c0_i32_0 : i32, i32, i32
  }
  func.func @transform_2(%arg0: i32) -> (i32, i32, i32) {
    %c0_i32 = arith.constant 0 : i32
    %c0_i32_0 = arith.constant 0 : i32
    %c0_i32_1 = arith.constant 0 : i32
    return %arg0, %c0_i32, %c0_i32_0 : i32, i32, i32
  }
}

</mosaic_0001>

<llo_original>
// kernel: tpu_custom_call.1
$region0: #{tpu_custom_call.1}
  #allocation0 [shape = 'u32[]', space=smem, size = 0x4, offset = 0x4, fixed_abs, tag = 'smem constant byte address 0x4 - core index']
  #allocation1 [shape = 'u32[72,128]{1,0:T(1,128)}', space=vmem, size = 0x9000, scoped, tag = 'internal scratch']
  %s0 = inlined_call_operand.vmem [shape: f32[1,768,1], index: 0, kind: input, shape index: {}]
  %s1 = inlined_call_operand.vmem [shape: f32[1,768,49], index: 1, kind: input, shape index: {}]
  %s2 = inlined_call_operand.vmem [shape: f32[1,768,49], index: 2, kind: output, shape index: {}]
  %s3 = sld [smem:[#allocation0]]
  $region18: #{tpu_custom_call.1} parent=0
    _
  %s5 = ssub.s32 1, %s3
  %s6 = scalar_select 0, %s5, %s3
  // Predicated region
  $region2: #{tpu_custom_call.1} parent=0 // pred_check
    _
  $region3: #{tpu_custom_call.1} parent=0 // pred_check_branch
    %8 = sbr.rel (0) target = $region5
  $region4: #{tpu_custom_call.1} parent=0 // pred_region
    _
  $region5: #{tpu_custom_call.1} parent=0 // pred_fallthru
    _
  // Predicated region
  $region6: #{tpu_custom_call.1} parent=0 // pred_check
    _
  $region7: #{tpu_custom_call.1} parent=0 // pred_check_branch
    %10 = sbr.rel (0) target = $region9
  $region8: #{tpu_custom_call.1} parent=0 // pred_region
    _
  $region9: #{tpu_custom_call.1} parent=0 // pred_fallthru
    _
  %v11 = vld [vmem:[%s1] sm:$0xff]
  %v12 = vld [vmem:[%s1 + $0x8] sm:$0xff]
  %v13 = vld [vmem:[%s1 + $0x10] sm:$0xff]
  %v14 = vld [vmem:[%s1 + $0x18] sm:$0xff]
  %v15 = vld [vmem:[%s1 + $0x20] sm:$0xff]
  %v16 = vld [vmem:[%s1 + $0x28] sm:$0xff]
  %v17 = vld [vmem:[%s1 + $0x30] sm:$0xff]
  %v18 = vld [vmem:[%s1 + $0x38] sm:$0xff]
  %v19 = vld [vmem:[%s1 + $0x40] sm:$0xff]
  %v20 = vld [vmem:[%s1 + $0x48] sm:$0xff]
  %v21 = vld [vmem:[%s1 + $0x50] sm:$0xff]
  %v22 = vld [vmem:[%s1 + $0x58] sm:$0xff]
  %v23 = vld [vmem:[%s1 + $0x60] sm:$0xff]
  %v24 = vld [vmem:[%s1 + $0x68] sm:$0xff]
  %v25 = vld [vmem:[%s1 + $0x70] sm:$0xff]
  %v26 = vld [vmem:[%s1 + $0x78] sm:$0xff]
  %v27 = vld [vmem:[%s1 + $0x80] sm:$0xff]
  %v28 = vld [vmem:[%s1 + $0x88] sm:$0xff]
  %v29 = vld [vmem:[%s1 + $0x90] sm:$0xff]
  %v30 = vld [vmem:[%s1 + $0x98] sm:$0xff]
  %v31 = vld [vmem:[%s1 + $0xa0] sm:$0xff]
  %v32 = vld [vmem:[%s1 + $0xa8] sm:$0xff]
  %v33 = vld [vmem:[%s1 + $0xb0] sm:$0xff]
  %v34 = vld [vmem:[%s1 + $0xb8] sm:$0xff]
  %v35 = vld [vmem:[%s1 + $0xc0] sm:$0xff]
  %v36 = vld [vmem:[%s1 + $0xc8] sm:$0xff]
  %v37 = vld [vmem:[%s1 + $0xd0] sm:$0xff]
  %v38 = vld [vmem:[%s1 + $0xd8] sm:$0xff]
  %v39 = vld [vmem:[%s1 + $0xe0] sm:$0xff]
  %v40 = vld [vmem:[%s1 + $0xe8] sm:$0xff]
  %v41 = vld [vmem:[%s1 + $0xf0] sm:$0xff]
  %v42 = vld [vmem:[%s1 + $0xf8] sm:$0xff]
  %v43 = vld [vmem:[%s1 + $0x100] sm:$0xff]
  %v44 = vld [vmem:[%s1 + $0x108] sm:$0xff]
  %v45 = vld [vmem:[%s1 + $0x110] sm:$0xff]
  %v46 = vld [vmem:[%s1 + $0x118] sm:$0xff]
  %v47 = vld [vmem:[%s1 + $0x120] sm:$0xff]
  %v48 = vld [vmem:[%s1 + $0x128] sm:$0xff]
  %v49 = vld [vmem:[%s1 + $0x130] sm:$0xff]
  %v50 = vld [vmem:[%s1 + $0x138] sm:$0xff]
  %v51 = vld [vmem:[%s1 + $0x140] sm:$0xff]
  %v52 = vld [vmem:[%s1 + $0x148] sm:$0xff]
  %v53 = vld [vmem:[%s1 + $0x150] sm:$0xff]
  %v54 = vld [vmem:[%s1 + $0x158] sm:$0xff]
  %v55 = vld [vmem:[%s1 + $0x160] sm:$0xff]
  %v56 = vld [vmem:[%s1 + $0x168] sm:$0xff]
  %v57 = vld [vmem:[%s1 + $0x170] sm:$0xff]
  %v58 = vld [vmem:[%s1 + $0x178] sm:$0xff]
  %v59 = vld [vmem:[%s1 + $0x180] sm:$0xff]
  %v60 = vld [vmem:[%s1 + $0x188] sm:$0xff]
  %v61 = vld [vmem:[%s1 + $0x190] sm:$0xff]
  %v62 = vld [vmem:[%s1 + $0x198] sm:$0xff]
  %v63 = vld [vmem:[%s1 + $0x1a0] sm:$0xff]
  %v64 = vld [vmem:[%s1 + $0x1a8] sm:$0xff]
  %v65 = vld [vmem:[%s1 + $0x1b0] sm:$0xff]
  %v66 = vld [vmem:[%s1 + $0x1b8] sm:$0xff]
  %v67 = vld [vmem:[%s1 + $0x1c0] sm:$0xff]
  %v68 = vld [vmem:[%s1 + $0x1c8] sm:$0xff]
  %v69 = vld [vmem:[%s1 + $0x1d0] sm:$0xff]
  %v70 = vld [vmem:[%s1 + $0x1d8] sm:$0xff]
  %v71 = vld [vmem:[%s1 + $0x1e0] sm:$0xff]
  %v72 = vld [vmem:[%s1 + $0x1e8] sm:$0xff]
  %v73 = vld [vmem:[%s1 + $0x1f0] sm:$0xff]
  %v74 = vld [vmem:[%s1 + $0x1f8] sm:$0xff]
  %v75 = vld [vmem:[%s1 + $0x200] sm:$0xff]
  %v76 = vld [vmem:[%s1 + $0x208] sm:$0xff]
  %v77 = vld [vmem:[%s1 + $0x210] sm:$0xff]
  %v78 = vld [vmem:[%s1 + $0x218] sm:$0xff]
  %v79 = vld [vmem:[%s1 + $0x220] sm:$0xff]
  %v80 = vld [vmem:[%s1 + $0x228] sm:$0xff]
  %v81 = vld [vmem:[%s1 + $0x230] sm:$0xff]
  %v82 = vld [vmem:[%s1 + $0x238] sm:$0xff]
  %v83 = vld [vmem:[%s1 + $0x240] sm:$0xff]
  %v84 = vld [vmem:[%s1 + $0x248] sm:$0xff]
  %v85 = vld [vmem:[%s1 + $0x250] sm:$0xff]
  %v86 = vld [vmem:[%s1 + $0x258] sm:$0xff]
  %v87 = vld [vmem:[%s1 + $0x260] sm:$0xff]
  %v88 = vld [vmem:[%s1 + $0x268] sm:$0xff]
  %v89 = vld [vmem:[%s1 + $0x270] sm:$0xff]
  %v90 = vld [vmem:[%s1 + $0x278] sm:$0xff]
  %v91 = vld [vmem:[%s1 + $0x280] sm:$0xff]
  %v92 = vld [vmem:[%s1 + $0x288] sm:$0xff]
  %v93 = vld [vmem:[%s1 + $0x290] sm:$0xff]
  %v94 = vld [vmem:[%s1 + $0x298] sm:$0xff]
  %v95 = vld [vmem:[%s1 + $0x2a0] sm:$0xff]
  %v96 = vld [vmem:[%s1 + $0x2a8] sm:$0xff]
  %v97 = vld [vmem:[%s1 + $0x2b0] sm:$0xff]
  %v98 = vld [vmem:[%s1 + $0x2b8] sm:$0xff]
  %v99 = vld [vmem:[%s1 + $0x2c0] sm:$0xff]
  %v100 = vld [vmem:[%s1 + $0x2c8] sm:$0xff]
  %v101 = vld [vmem:[%s1 + $0x2d0] sm:$0xff]
  %v102 = vld [vmem:[%s1 + $0x2d8] sm:$0xff]
  %v103 = vld [vmem:[%s1 + $0x2e0] sm:$0xff]
  %v104 = vld [vmem:[%s1 + $0x2e8] sm:$0xff]
  %v105 = vld [vmem:[%s1 + $0x2f0] sm:$0xff]
  %v106 = vld [vmem:[%s1 + $0x2f8] sm:$0xff]
  %v107 = vld [vmem:[%s0] sm:$0xff]
  %v108 = vld [vmem:[%s0 + $0x8] sm:$0xff]
  %v109 = vld [vmem:[%s0 + $0x10] sm:$0xff]
  %v110 = vld [vmem:[%s0 + $0x18] sm:$0xff]
  %v111 = vld [vmem:[%s0 + $0x20] sm:$0xff]
  %v112 = vld [vmem:[%s0 + $0x28] sm:$0xff]
  %v113 = vld [vmem:[%s0 + $0x30] sm:$0xff]
  %v114 = vld [vmem:[%s0 + $0x38] sm:$0xff]
  %v115 = vld [vmem:[%s0 + $0x40] sm:$0xff]
  %v116 = vld [vmem:[%s0 + $0x48] sm:$0xff]
  %v117 = vld [vmem:[%s0 + $0x50] sm:$0xff]
  %v118 = vld [vmem:[%s0 + $0x58] sm:$0xff]
  %v119 = vld [vmem:[%s0 + $0x60] sm:$0xff]
  %v120 = vld [vmem:[%s0 + $0x68] sm:$0xff]
  %v121 = vld [vmem:[%s0 + $0x70] sm:$0xff]
  %v122 = vld [vmem:[%s0 + $0x78] sm:$0xff]
  %v123 = vld [vmem:[%s0 + $0x80] sm:$0xff]
  %v124 = vld [vmem:[%s0 + $0x88] sm:$0xff]
  %v125 = vld [vmem:[%s0 + $0x90] sm:$0xff]
  %v126 = vld [vmem:[%s0 + $0x98] sm:$0xff]
  %v127 = vld [vmem:[%s0 + $0xa0] sm:$0xff]
  %v128 = vld [vmem:[%s0 + $0xa8] sm:$0xff]
  %v129 = vld [vmem:[%s0 + $0xb0] sm:$0xff]
  %v130 = vld [vmem:[%s0 + $0xb8] sm:$0xff]
  %v131 = vld [vmem:[%s0 + $0xc0] sm:$0xff]
  %v132 = vld [vmem:[%s0 + $0xc8] sm:$0xff]
  %v133 = vld [vmem:[%s0 + $0xd0] sm:$0xff]
  %v134 = vld [vmem:[%s0 + $0xd8] sm:$0xff]
  %v135 = vld [vmem:[%s0 + $0xe0] sm:$0xff]
  %v136 = vld [vmem:[%s0 + $0xe8] sm:$0xff]
  %v137 = vld [vmem:[%s0 + $0xf0] sm:$0xff]
  %v138 = vld [vmem:[%s0 + $0xf8] sm:$0xff]
  %v139 = vld [vmem:[%s0 + $0x100] sm:$0xff]
  %v140 = vld [vmem:[%s0 + $0x108] sm:$0xff]
  %v141 = vld [vmem:[%s0 + $0x110] sm:$0xff]
  %v142 = vld [vmem:[%s0 + $0x118] sm:$0xff]
  %v143 = vld [vmem:[%s0 + $0x120] sm:$0xff]
  %v144 = vld [vmem:[%s0 + $0x128] sm:$0xff]
  %v145 = vld [vmem:[%s0 + $0x130] sm:$0xff]
  %v146 = vld [vmem:[%s0 + $0x138] sm:$0xff]
  %v147 = vld [vmem:[%s0 + $0x140] sm:$0xff]
  %v148 = vld [vmem:[%s0 + $0x148] sm:$0xff]
  %v149 = vld [vmem:[%s0 + $0x150] sm:$0xff]
  %v150 = vld [vmem:[%s0 + $0x158] sm:$0xff]
  %v151 = vld [vmem:[%s0 + $0x160] sm:$0xff]
  %v152 = vld [vmem:[%s0 + $0x168] sm:$0xff]
  %v153 = vld [vmem:[%s0 + $0x170] sm:$0xff]
  %v154 = vld [vmem:[%s0 + $0x178] sm:$0xff]
  %v155 = vld [vmem:[%s0 + $0x180] sm:$0xff]
  %v156 = vld [vmem:[%s0 + $0x188] sm:$0xff]
  %v157 = vld [vmem:[%s0 + $0x190] sm:$0xff]
  %v158 = vld [vmem:[%s0 + $0x198] sm:$0xff]
  %v159 = vld [vmem:[%s0 + $0x1a0] sm:$0xff]
  %v160 = vld [vmem:[%s0 + $0x1a8] sm:$0xff]
  %v161 = vld [vmem:[%s0 + $0x1b0] sm:$0xff]
  %v162 = vld [vmem:[%s0 + $0x1b8] sm:$0xff]
  %v163 = vld [vmem:[%s0 + $0x1c0] sm:$0xff]
  %v164 = vld [vmem:[%s0 + $0x1c8] sm:$0xff]
  %v165 = vld [vmem:[%s0 + $0x1d0] sm:$0xff]
  %v166 = vld [vmem:[%s0 + $0x1d8] sm:$0xff]
  %v167 = vld [vmem:[%s0 + $0x1e0] sm:$0xff]
  %v168 = vld [vmem:[%s0 + $0x1e8] sm:$0xff]
  %v169 = vld [vmem:[%s0 + $0x1f0] sm:$0xff]
  %v170 = vld [vmem:[%s0 + $0x1f8] sm:$0xff]
  %v171 = vld [vmem:[%s0 + $0x200] sm:$0xff]
  %v172 = vld [vmem:[%s0 + $0x208] sm:$0xff]
  %v173 = vld [vmem:[%s0 + $0x210] sm:$0xff]
  %v174 = vld [vmem:[%s0 + $0x218] sm:$0xff]
  %v175 = vld [vmem:[%s0 + $0x220] sm:$0xff]
  %v176 = vld [vmem:[%s0 + $0x228] sm:$0xff]
  %v177 = vld [vmem:[%s0 + $0x230] sm:$0xff]
  %v178 = vld [vmem:[%s0 + $0x238] sm:$0xff]
  %v179 = vld [vmem:[%s0 + $0x240] sm:$0xff]
  %v180 = vld [vmem:[%s0 + $0x248] sm:$0xff]
  %v181 = vld [vmem:[%s0 + $0x250] sm:$0xff]
  %v182 = vld [vmem:[%s0 + $0x258] sm:$0xff]
  %v183 = vld [vmem:[%s0 + $0x260] sm:$0xff]
  %v184 = vld [vmem:[%s0 + $0x268] sm:$0xff]
  %v185 = vld [vmem:[%s0 + $0x270] sm:$0xff]
  %v186 = vld [vmem:[%s0 + $0x278] sm:$0xff]
  %v187 = vld [vmem:[%s0 + $0x280] sm:$0xff]
  %v188 = vld [vmem:[%s0 + $0x288] sm:$0xff]
  %v189 = vld [vmem:[%s0 + $0x290] sm:$0xff]
  %v190 = vld [vmem:[%s0 + $0x298] sm:$0xff]
  %v191 = vld [vmem:[%s0 + $0x2a0] sm:$0xff]
  %v192 = vld [vmem:[%s0 + $0x2a8] sm:$0xff]
  %v193 = vld [vmem:[%s0 + $0x2b0] sm:$0xff]
  %v194 = vld [vmem:[%s0 + $0x2b8] sm:$0xff]
  %v195 = vld [vmem:[%s0 + $0x2c0] sm:$0xff]
  %v196 = vld [vmem:[%s0 + $0x2c8] sm:$0xff]
  %v197 = vld [vmem:[%s0 + $0x2d0] sm:$0xff]
  %v198 = vld [vmem:[%s0 + $0x2d8] sm:$0xff]
  %v199 = vld [vmem:[%s0 + $0x2e0] sm:$0xff]
  %v200 = vld [vmem:[%s0 + $0x2e8] sm:$0xff]
  %v201 = vld [vmem:[%s0 + $0x2f0] sm:$0xff]
  %v202 = vld [vmem:[%s0 + $0x2f8] sm:$0xff]
  %204 = vset.pattern.permute.xlu0 0
  %205 = vperm.xlu0 %204, %v107
  %v206 = vpop.permute.xlu0 %205
  %209 = vset.pattern.permute.xlu0 0
  %210 = vperm.xlu0 %209, %v108
  %v211 = vpop.permute.xlu0 %210
  %214 = vset.pattern.permute.xlu0 0
  %215 = vperm.xlu0 %214, %v109
  %v216 = vpop.permute.xlu0 %215
  %219 = vset.pattern.permute.xlu0 0
  %220 = vperm.xlu0 %219, %v110
  %v221 = vpop.permute.xlu0 %220
  %224 = vset.pattern.permute.xlu0 0
  %225 = vperm.xlu0 %224, %v111
  %v226 = vpop.permute.xlu0 %225
  %229 = vset.pattern.permute.xlu0 0
  %230 = vperm.xlu0 %229, %v112
  %v231 = vpop.permute.xlu0 %230
  %234 = vset.pattern.permute.xlu0 0
  %235 = vperm.xlu0 %234, %v113
  %v236 = vpop.permute.xlu0 %235
  %239 = vset.pattern.permute.xlu0 0
  %240 = vperm.xlu0 %239, %v114
  %v241 = vpop.permute.xlu0 %240
  %244 = vset.pattern.permute.xlu0 0
  %245 = vperm.xlu0 %244, %v115
  %v246 = vpop.permute.xlu0 %245
  %249 = vset.pattern.permute.xlu0 0
  %250 = vperm.xlu0 %249, %v116
  %v251 = vpop.permute.xlu0 %250
  %254 = vset.pattern.permute.xlu0 0
  %255 = vperm.xlu0 %254, %v117
  %v256 = vpop.permute.xlu0 %255
  %259 = vset.pattern.permute.xlu0 0
  %260 = vperm.xlu0 %259, %v118
  %v261 = vpop.permute.xlu0 %260
  %264 = vset.pattern.permute.xlu0 0
  %265 = vperm.xlu0 %264, %v119
  %v266 = vpop.permute.xlu0 %265
  %269 = vset.pattern.permute.xlu0 0
  %270 = vperm.xlu0 %269, %v120
  %v271 = vpop.permute.xlu0 %270
  %274 = vset.pattern.permute.xlu0 0
  %275 = vperm.xlu0 %274, %v121
  %v276 = vpop.permute.xlu0 %275
  %279 = vset.pattern.permute.xlu0 0
  %280 = vperm.xlu0 %279, %v122
  %v281 = vpop.permute.xlu0 %280
  %284 = vset.pattern.permute.xlu0 0
  %285 = vperm.xlu0 %284, %v123
  %v286 = vpop.permute.xlu0 %285
  %289 = vset.pattern.permute.xlu0 0
  %290 = vperm.xlu0 %289, %v124
  %v291 = vpop.permute.xlu0 %290
  %294 = vset.pattern.permute.xlu0 0
  %295 = vperm.xlu0 %294, %v125
  %v296 = vpop.permute.xlu0 %295
  %299 = vset.pattern.permute.xlu0 0
  %300 = vperm.xlu0 %299, %v126
  %v301 = vpop.permute.xlu0 %300
  %304 = vset.pattern.permute.xlu0 0
  %305 = vperm.xlu0 %304, %v127
  %v306 = vpop.permute.xlu0 %305
  %309 = vset.pattern.permute.xlu0 0
  %310 = vperm.xlu0 %309, %v128
  %v311 = vpop.permute.xlu0 %310
  %314 = vset.pattern.permute.xlu0 0
  %315 = vperm.xlu0 %314, %v129
  %v316 = vpop.permute.xlu0 %315
  %319 = vset.pattern.permute.xlu0 0
  %320 = vperm.xlu0 %319, %v130
  %v321 = vpop.permute.xlu0 %320
  %324 = vset.pattern.permute.xlu0 0
  %325 = vperm.xlu0 %324, %v131
  %v326 = vpop.permute.xlu0 %325
  %329 = vset.pattern.permute.xlu0 0
  %330 = vperm.xlu0 %329, %v132
  %v331 = vpop.permute.xlu0 %330
  %334 = vset.pattern.permute.xlu0 0
  %335 = vperm.xlu0 %334, %v133
  %v336 = vpop.permute.xlu0 %335
  %339 = vset.pattern.permute.xlu0 0
  %340 = vperm.xlu0 %339, %v134
  %v341 = vpop.permute.xlu0 %340
  %344 = vset.pattern.permute.xlu0 0
  %345 = vperm.xlu0 %344, %v135
  %v346 = vpop.permute.xlu0 %345
  %349 = vset.pattern.permute.xlu0 0
  %350 = vperm.xlu0 %349, %v136
  %v351 = vpop.permute.xlu0 %350
  %354 = vset.pattern.permute.xlu0 0
  %355 = vperm.xlu0 %354, %v137
  %v356 = vpop.permute.xlu0 %355
  %359 = vset.pattern.permute.xlu0 0
  %360 = vperm.xlu0 %359, %v138
  %v361 = vpop.permute.xlu0 %360
  %364 = vset.pattern.permute.xlu0 0
  %365 = vperm.xlu0 %364, %v139
  %v366 = vpop.permute.xlu0 %365
  %369 = vset.pattern.permute.xlu0 0
  %370 = vperm.xlu0 %369, %v140
  %v371 = vpop.permute.xlu0 %370
  %374 = vset.pattern.permute.xlu0 0
  %375 = vperm.xlu0 %374, %v141
  %v376 = vpop.permute.xlu0 %375
  %379 = vset.pattern.permute.xlu0 0
  %380 = vperm.xlu0 %379, %v142
  %v381 = vpop.permute.xlu0 %380
  %384 = vset.pattern.permute.xlu0 0
  %385 = vperm.xlu0 %384, %v143
  %v386 = vpop.permute.xlu0 %385
  %389 = vset.pattern.permute.xlu0 0
  %390 = vperm.xlu0 %389, %v144
  %v391 = vpop.permute.xlu0 %390
  %394 = vset.pattern.permute.xlu0 0
  %395 = vperm.xlu0 %394, %v145
  %v396 = vpop.permute.xlu0 %395
  %399 = vset.pattern.permute.xlu0 0
  %400 = vperm.xlu0 %399, %v146
  %v401 = vpop.permute.xlu0 %400
  %404 = vset.pattern.permute.xlu0 0
  %405 = vperm.xlu0 %404, %v147
  %v406 = vpop.permute.xlu0 %405
  %409 = vset.pattern.permute.xlu0 0
  %410 = vperm.xlu0 %409, %v148
  %v411 = vpop.permute.xlu0 %410
  %414 = vset.pattern.permute.xlu0 0
  %415 = vperm.xlu0 %414, %v149
  %v416 = vpop.permute.xlu0 %415
  %419 = vset.pattern.permute.xlu0 0
  %420 = vperm.xlu0 %419, %v150
  %v421 = vpop.permute.xlu0 %420
  %424 = vset.pattern.permute.xlu0 0
  %425 = vperm.xlu0 %424, %v151
  %v426 = vpop.permute.xlu0 %425
  %429 = vset.pattern.permute.xlu0 0
  %430 = vperm.xlu0 %429, %v152
  %v431 = vpop.permute.xlu0 %430
  %434 = vset.pattern.permute.xlu0 0
  %435 = vperm.xlu0 %434, %v153
  %v436 = vpop.permute.xlu0 %435
  %439 = vset.pattern.permute.xlu0 0
  %440 = vperm.xlu0 %439, %v154
  %v441 = vpop.permute.xlu0 %440
  %444 = vset.pattern.permute.xlu0 0
  %445 = vperm.xlu0 %444, %v155
  %v446 = vpop.permute.xlu0 %445
  %449 = vset.pattern.permute.xlu0 0
  %450 = vperm.xlu0 %449, %v156
  %v451 = vpop.permute.xlu0 %450
  %454 = vset.pattern.permute.xlu0 0
  %455 = vperm.xlu0 %454, %v157
  %v456 = vpop.permute.xlu0 %455
  %459 = vset.pattern.permute.xlu0 0
  %460 = vperm.xlu0 %459, %v158
  %v461 = vpop.permute.xlu0 %460
  %464 = vset.pattern.permute.xlu0 0
  %465 = vperm.xlu0 %464, %v159
  %v466 = vpop.permute.xlu0 %465
  %469 = vset.pattern.permute.xlu0 0
  %470 = vperm.xlu0 %469, %v160
  %v471 = vpop.permute.xlu0 %470
  %474 = vset.pattern.permute.xlu0 0
  %475 = vperm.xlu0 %474, %v161
  %v476 = vpop.permute.xlu0 %475
  %479 = vset.pattern.permute.xlu0 0
  %480 = vperm.xlu0 %479, %v162
  %v481 = vpop.permute.xlu0 %480
  %484 = vset.pattern.permute.xlu0 0
  %485 = vperm.xlu0 %484, %v163
  %v486 = vpop.permute.xlu0 %485
  %489 = vset.pattern.permute.xlu0 0
  %490 = vperm.xlu0 %489, %v164
  %v491 = vpop.permute.xlu0 %490
  %494 = vset.pattern.permute.xlu0 0
  %495 = vperm.xlu0 %494, %v165
  %v496 = vpop.permute.xlu0 %495
  %499 = vset.pattern.permute.xlu0 0
  %500 = vperm.xlu0 %499, %v166
  %v501 = vpop.permute.xlu0 %500
  %504 = vset.pattern.permute.xlu0 0
  %505 = vperm.xlu0 %504, %v167
  %v506 = vpop.permute.xlu0 %505
  %509 = vset.pattern.permute.xlu0 0
  %510 = vperm.xlu0 %509, %v168
  %v511 = vpop.permute.xlu0 %510
  %514 = vset.pattern.permute.xlu0 0
  %515 = vperm.xlu0 %514, %v169
  %v516 = vpop.permute.xlu0 %515
  %519 = vset.pattern.permute.xlu0 0
  %520 = vperm.xlu0 %519, %v170
  %v521 = vpop.permute.xlu0 %520
  %524 = vset.pattern.permute.xlu0 0
  %525 = vperm.xlu0 %524, %v171
  %v526 = vpop.permute.xlu0 %525
  %529 = vset.pattern.permute.xlu0 0
  %530 = vperm.xlu0 %529, %v172
  %v531 = vpop.permute.xlu0 %530
  %534 = vset.pattern.permute.xlu0 0
  %535 = vperm.xlu0 %534, %v173
  %v536 = vpop.permute.xlu0 %535
  %539 = vset.pattern.permute.xlu0 0
  %540 = vperm.xlu0 %539, %v174
  %v541 = vpop.permute.xlu0 %540
  %544 = vset.pattern.permute.xlu0 0
  %545 = vperm.xlu0 %544, %v175
  %v546 = vpop.permute.xlu0 %545
  %549 = vset.pattern.permute.xlu0 0
  %550 = vperm.xlu0 %549, %v176
  %v551 = vpop.permute.xlu0 %550
  %554 = vset.pattern.permute.xlu0 0
  %555 = vperm.xlu0 %554, %v177
  %v556 = vpop.permute.xlu0 %555
  %559 = vset.pattern.permute.xlu0 0
  %560 = vperm.xlu0 %559, %v178
  %v561 = vpop.permute.xlu0 %560
  %564 = vset.pattern.permute.xlu0 0
  %565 = vperm.xlu0 %564, %v179
  %v566 = vpop.permute.xlu0 %565
  %569 = vset.pattern.permute.xlu0 0
  %570 = vperm.xlu0 %569, %v180
  %v571 = vpop.permute.xlu0 %570
  %574 = vset.pattern.permute.xlu0 0
  %575 = vperm.xlu0 %574, %v181
  %v576 = vpop.permute.xlu0 %575
  %579 = vset.pattern.permute.xlu0 0
  %580 = vperm.xlu0 %579, %v182
  %v581 = vpop.permute.xlu0 %580
  %584 = vset.pattern.permute.xlu0 0
  %585 = vperm.xlu0 %584, %v183
  %v586 = vpop.permute.xlu0 %585
  %589 = vset.pattern.permute.xlu0 0
  %590 = vperm.xlu0 %589, %v184
  %v591 = vpop.permute.xlu0 %590
  %594 = vset.pattern.permute.xlu0 0
  %595 = vperm.xlu0 %594, %v185
  %v596 = vpop.permute.xlu0 %595
  %599 = vset.pattern.permute.xlu0 0
  %600 = vperm.xlu0 %599, %v186
  %v601 = vpop.permute.xlu0 %600
  %604 = vset.pattern.permute.xlu0 0
  %605 = vperm.xlu0 %604, %v187
  %v606 = vpop.permute.xlu0 %605
  %609 = vset.pattern.permute.xlu0 0
  %610 = vperm.xlu0 %609, %v188
  %v611 = vpop.permute.xlu0 %610
  %614 = vset.pattern.permute.xlu0 0
  %615 = vperm.xlu0 %614, %v189
  %v616 = vpop.permute.xlu0 %615
  %619 = vset.pattern.permute.xlu0 0
  %620 = vperm.xlu0 %619, %v190
  %v621 = vpop.permute.xlu0 %620
  %624 = vset.pattern.permute.xlu0 0
  %625 = vperm.xlu0 %624, %v191
  %v626 = vpop.permute.xlu0 %625
  %629 = vset.pattern.permute.xlu0 0
  %630 = vperm.xlu0 %629, %v192
  %v631 = vpop.permute.xlu0 %630
  %634 = vset.pattern.permute.xlu0 0
  %635 = vperm.xlu0 %634, %v193
  %v636 = vpop.permute.xlu0 %635
  %639 = vset.pattern.permute.xlu0 0
  %640 = vperm.xlu0 %639, %v194
  %v641 = vpop.permute.xlu0 %640
  %644 = vset.pattern.permute.xlu0 0
  %645 = vperm.xlu0 %644, %v195
  %v646 = vpop.permute.xlu0 %645
  %649 = vset.pattern.permute.xlu0 0
  %650 = vperm.xlu0 %649, %v196
  %v651 = vpop.permute.xlu0 %650
  %654 = vset.pattern.permute.xlu0 0
  %655 = vperm.xlu0 %654, %v197
  %v656 = vpop.permute.xlu0 %655
  %659 = vset.pattern.permute.xlu0 0
  %660 = vperm.xlu0 %659, %v198
  %v661 = vpop.permute.xlu0 %660
  %664 = vset.pattern.permute.xlu0 0
  %665 = vperm.xlu0 %664, %v199
  %v666 = vpop.permute.xlu0 %665
  %669 = vset.pattern.permute.xlu0 0
  %670 = vperm.xlu0 %669, %v200
  %v671 = vpop.permute.xlu0 %670
  %674 = vset.pattern.permute.xlu0 0
  %675 = vperm.xlu0 %674, %v201
  %v676 = vpop.permute.xlu0 %675
  %679 = vset.pattern.permute.xlu0 0
  %680 = vperm.xlu0 %679, %v202
  %v681 = vpop.permute.xlu0 %680
  %v683 = vmul.f32 %v11, %v206
  %v684 = vmul.f32 %v12, %v211
  %v685 = vmul.f32 %v13, %v216
  %v686 = vmul.f32 %v14, %v221
  %v687 = vmul.f32 %v15, %v226
  %v688 = vmul.f32 %v16, %v231
  %v689 = vmul.f32 %v17, %v236
  %v690 = vmul.f32 %v18, %v241
  %v691 = vmul.f32 %v19, %v246
  %v692 = vmul.f32 %v20, %v251
  %v693 = vmul.f32 %v21, %v256
  %v694 = vmul.f32 %v22, %v261
  %v695 = vmul.f32 %v23, %v266
  %v696 = vmul.f32 %v24, %v271
  %v697 = vmul.f32 %v25, %v276
  %v698 = vmul.f32 %v26, %v281
  %v699 = vmul.f32 %v27, %v286
  %v700 = vmul.f32 %v28, %v291
  %v701 = vmul.f32 %v29, %v296
  %v702 = vmul.f32 %v30, %v301
  %v703 = vmul.f32 %v31, %v306
  %v704 = vmul.f32 %v32, %v311
  %v705 = vmul.f32 %v33, %v316
  %v706 = vmul.f32 %v34, %v321
  %v707 = vmul.f32 %v35, %v326
  %v708 = vmul.f32 %v36, %v331
  %v709 = vmul.f32 %v37, %v336
  %v710 = vmul.f32 %v38, %v341
  %v711 = vmul.f32 %v39, %v346
  %v712 = vmul.f32 %v40, %v351
  %v713 = vmul.f32 %v41, %v356
  %v714 = vmul.f32 %v42, %v361
  %v715 = vmul.f32 %v43, %v366
  %v716 = vmul.f32 %v44, %v371
  %v717 = vmul.f32 %v45, %v376
  %v718 = vmul.f32 %v46, %v381
  %v719 = vmul.f32 %v47, %v386
  %v720 = vmul.f32 %v48, %v391
  %v721 = vmul.f32 %v49, %v396
  %v722 = vmul.f32 %v50, %v401
  %v723 = vmul.f32 %v51, %v406
  %v724 = vmul.f32 %v52, %v411
  %v725 = vmul.f32 %v53, %v416
  %v726 = vmul.f32 %v54, %v421
  %v727 = vmul.f32 %v55, %v426
  %v728 = vmul.f32 %v56, %v431
  %v729 = vmul.f32 %v57, %v436
  %v730 = vmul.f32 %v58, %v441
  %v731 = vmul.f32 %v59, %v446
  %v732 = vmul.f32 %v60, %v451
  %v733 = vmul.f32 %v61, %v456
  %v734 = vmul.f32 %v62, %v461
  %v735 = vmul.f32 %v63, %v466
  %v736 = vmul.f32 %v64, %v471
  %v737 = vmul.f32 %v65, %v476
  %v738 = vmul.f32 %v66, %v481
  %v739 = vmul.f32 %v67, %v486
  %v740 = vmul.f32 %v68, %v491
  %v741 = vmul.f32 %v69, %v496
  %v742 = vmul.f32 %v70, %v501
  %v743 = vmul.f32 %v71, %v506
  %v744 = vmul.f32 %v72, %v511
  %v745 = vmul.f32 %v73, %v516
  %v746 = vmul.f32 %v74, %v521
  %v747 = vmul.f32 %v75, %v526
  %v748 = vmul.f32 %v76, %v531
  %v749 = vmul.f32 %v77, %v536
  %v750 = vmul.f32 %v78, %v541
  %v751 = vmul.f32 %v79, %v546
  %v752 = vmul.f32 %v80, %v551
  %v753 = vmul.f32 %v81, %v556
  %v754 = vmul.f32 %v82, %v561
  %v755 = vmul.f32 %v83, %v566
  %v756 = vmul.f32 %v84, %v571
  %v757 = vmul.f32 %v85, %v576
  %v758 = vmul.f32 %v86, %v581
  %v759 = vmul.f32 %v87, %v586
  %v760 = vmul.f32 %v88, %v591
  %v761 = vmul.f32 %v89, %v596
  %v762 = vmul.f32 %v90, %v601
  %v763 = vmul.f32 %v91, %v606
  %v764 = vmul.f32 %v92, %v611
  %v765 = vmul.f32 %v93, %v616
  %v766 = vmul.f32 %v94, %v621
  %v767 = vmul.f32 %v95, %v626
  %v768 = vmul.f32 %v96, %v631
  %v769 = vmul.f32 %v97, %v636
  %v770 = vmul.f32 %v98, %v641
  %v771 = vmul.f32 %v99, %v646
  %v772 = vmul.f32 %v100, %v651
  %v773 = vmul.f32 %v101, %v656
  %v774 = vmul.f32 %v102, %v661
  %v775 = vmul.f32 %v103, %v666
  %v776 = vmul.f32 %v104, %v671
  %v777 = vmul.f32 %v105, %v676
  %v778 = vmul.f32 %v106, %v681
  %vm779 = vcmask 400384
  %780 = vst.msk [vmem:[%s2] sm:$0xff] %vm779, %v683
  %781 = vst.msk [vmem:[%s2 + $0x8] sm:$0xff] %vm779, %v684
  %782 = vst.msk [vmem:[%s2 + $0x10] sm:$0xff] %vm779, %v685
  %783 = vst.msk [vmem:[%s2 + $0x18] sm:$0xff] %vm779, %v686
  %784 = vst.msk [vmem:[%s2 + $0x20] sm:$0xff] %vm779, %v687
  %785 = vst.msk [vmem:[%s2 + $0x28] sm:$0xff] %vm779, %v688
  %786 = vst.msk [vmem:[%s2 + $0x30] sm:$0xff] %vm779, %v689
  %787 = vst.msk [vmem:[%s2 + $0x38] sm:$0xff] %vm779, %v690
  %788 = vst.msk [vmem:[%s2 + $0x40] sm:$0xff] %vm779, %v691
  %789 = vst.msk [vmem:[%s2 + $0x48] sm:$0xff] %vm779, %v692
  %790 = vst.msk [vmem:[%s2 + $0x50] sm:$0xff] %vm779, %v693
  %791 = vst.msk [vmem:[%s2 + $0x58] sm:$0xff] %vm779, %v694
  %792 = vst.msk [vmem:[%s2 + $0x60] sm:$0xff] %vm779, %v695
  %793 = vst.msk [vmem:[%s2 + $0x68] sm:$0xff] %vm779, %v696
  %794 = vst.msk [vmem:[%s2 + $0x70] sm:$0xff] %vm779, %v697
  %795 = vst.msk [vmem:[%s2 + $0x78] sm:$0xff] %vm779, %v698
  %796 = vst.msk [vmem:[%s2 + $0x80] sm:$0xff] %vm779, %v699
  %797 = vst.msk [vmem:[%s2 + $0x88] sm:$0xff] %vm779, %v700
  %798 = vst.msk [vmem:[%s2 + $0x90] sm:$0xff] %vm779, %v701
  %799 = vst.msk [vmem:[%s2 + $0x98] sm:$0xff] %vm779, %v702
  %800 = vst.msk [vmem:[%s2 + $0xa0] sm:$0xff] %vm779, %v703
  %801 = vst.msk [vmem:[%s2 + $0xa8] sm:$0xff] %vm779, %v704
  %802 = vst.msk [vmem:[%s2 + $0xb0] sm:$0xff] %vm779, %v705
  %803 = vst.msk [vmem:[%s2 + $0xb8] sm:$0xff] %vm779, %v706
  %804 = vst.msk [vmem:[%s2 + $0xc0] sm:$0xff] %vm779, %v707
  %805 = vst.msk [vmem:[%s2 + $0xc8] sm:$0xff] %vm779, %v708
  %806 = vst.msk [vmem:[%s2 + $0xd0] sm:$0xff] %vm779, %v709
  %807 = vst.msk [vmem:[%s2 + $0xd8] sm:$0xff] %vm779, %v710
  %808 = vst.msk [vmem:[%s2 + $0xe0] sm:$0xff] %vm779, %v711
  %809 = vst.msk [vmem:[%s2 + $0xe8] sm:$0xff] %vm779, %v712
  %810 = vst.msk [vmem:[%s2 + $0xf0] sm:$0xff] %vm779, %v713
  %811 = vst.msk [vmem:[%s2 + $0xf8] sm:$0xff] %vm779, %v714
  %812 = vst.msk [vmem:[%s2 + $0x100] sm:$0xff] %vm779, %v715
  %813 = vst.msk [vmem:[%s2 + $0x108] sm:$0xff] %vm779, %v716
  %814 = vst.msk [vmem:[%s2 + $0x110] sm:$0xff] %vm779, %v717
  %815 = vst.msk [vmem:[%s2 + $0x118] sm:$0xff] %vm779, %v718
  %816 = vst.msk [vmem:[%s2 + $0x120] sm:$0xff] %vm779, %v719
  %817 = vst.msk [vmem:[%s2 + $0x128] sm:$0xff] %vm779, %v720
  %818 = vst.msk [vmem:[%s2 + $0x130] sm:$0xff] %vm779, %v721
  %819 = vst.msk [vmem:[%s2 + $0x138] sm:$0xff] %vm779, %v722
  %820 = vst.msk [vmem:[%s2 + $0x140] sm:$0xff] %vm779, %v723
  %821 = vst.msk [vmem:[%s2 + $0x148] sm:$0xff] %vm779, %v724
  %822 = vst.msk [vmem:[%s2 + $0x150] sm:$0xff] %vm779, %v725
  %823 = vst.msk [vmem:[%s2 + $0x158] sm:$0xff] %vm779, %v726
  %824 = vst.msk [vmem:[%s2 + $0x160] sm:$0xff] %vm779, %v727
  %825 = vst.msk [vmem:[%s2 + $0x168] sm:$0xff] %vm779, %v728
  %826 = vst.msk [vmem:[%s2 + $0x170] sm:$0xff] %vm779, %v729
  %827 = vst.msk [vmem:[%s2 + $0x178] sm:$0xff] %vm779, %v730
  %828 = vst.msk [vmem:[%s2 + $0x180] sm:$0xff] %vm779, %v731
  %829 = vst.msk [vmem:[%s2 + $0x188] sm:$0xff] %vm779, %v732
  %830 = vst.msk [vmem:[%s2 + $0x190] sm:$0xff] %vm779, %v733
  %831 = vst.msk [vmem:[%s2 + $0x198] sm:$0xff] %vm779, %v734
  %832 = vst.msk [vmem:[%s2 + $0x1a0] sm:$0xff] %vm779, %v735
  %833 = vst.msk [vmem:[%s2 + $0x1a8] sm:$0xff] %vm779, %v736
  %834 = vst.msk [vmem:[%s2 + $0x1b0] sm:$0xff] %vm779, %v737
  %835 = vst.msk [vmem:[%s2 + $0x1b8] sm:$0xff] %vm779, %v738
  %836 = vst.msk [vmem:[%s2 + $0x1c0] sm:$0xff] %vm779, %v739
  %837 = vst.msk [vmem:[%s2 + $0x1c8] sm:$0xff] %vm779, %v740
  %838 = vst.msk [vmem:[%s2 + $0x1d0] sm:$0xff] %vm779, %v741
  %839 = vst.msk [vmem:[%s2 + $0x1d8] sm:$0xff] %vm779, %v742
  %840 = vst.msk [vmem:[%s2 + $0x1e0] sm:$0xff] %vm779, %v743
  %841 = vst.msk [vmem:[%s2 + $0x1e8] sm:$0xff] %vm779, %v744
  %842 = vst.msk [vmem:[%s2 + $0x1f0] sm:$0xff] %vm779, %v745
  %843 = vst.msk [vmem:[%s2 + $0x1f8] sm:$0xff] %vm779, %v746
  %844 = vst.msk [vmem:[%s2 + $0x200] sm:$0xff] %vm779, %v747
  %845 = vst.msk [vmem:[%s2 + $0x208] sm:$0xff] %vm779, %v748
  %846 = vst.msk [vmem:[%s2 + $0x210] sm:$0xff] %vm779, %v749
  %847 = vst.msk [vmem:[%s2 + $0x218] sm:$0xff] %vm779, %v750
  %848 = vst.msk [vmem:[%s2 + $0x220] sm:$0xff] %vm779, %v751
  %849 = vst.msk [vmem:[%s2 + $0x228] sm:$0xff] %vm779, %v752
  %850 = vst.msk [vmem:[%s2 + $0x230] sm:$0xff] %vm779, %v753
  %851 = vst.msk [vmem:[%s2 + $0x238] sm:$0xff] %vm779, %v754
  %852 = vst.msk [vmem:[%s2 + $0x240] sm:$0xff] %vm779, %v755
  %853 = vst.msk [vmem:[%s2 + $0x248] sm:$0xff] %vm779, %v756
  %854 = vst.msk [vmem:[%s2 + $0x250] sm:$0xff] %vm779, %v757
  %855 = vst.msk [vmem:[%s2 + $0x258] sm:$0xff] %vm779, %v758
  %856 = vst.msk [vmem:[%s2 + $0x260] sm:$0xff] %vm779, %v759
  %857 = vst.msk [vmem:[%s2 + $0x268] sm:$0xff] %vm779, %v760
  %858 = vst.msk [vmem:[%s2 + $0x270] sm:$0xff] %vm779, %v761
  %859 = vst.msk [vmem:[%s2 + $0x278] sm:$0xff] %vm779, %v762
  %860 = vst.msk [vmem:[%s2 + $0x280] sm:$0xff] %vm779, %v763
  %861 = vst.msk [vmem:[%s2 + $0x288] sm:$0xff] %vm779, %v764
  %862 = vst.msk [vmem:[%s2 + $0x290] sm:$0xff] %vm779, %v765
  %863 = vst.msk [vmem:[%s2 + $0x298] sm:$0xff] %vm779, %v766
  %864 = vst.msk [vmem:[%s2 + $0x2a0] sm:$0xff] %vm779, %v767
  %865 = vst.msk [vmem:[%s2 + $0x2a8] sm:$0xff] %vm779, %v768
  %866 = vst.msk [vmem:[%s2 + $0x2b0] sm:$0xff] %vm779, %v769
  %867 = vst.msk [vmem:[%s2 + $0x2b8] sm:$0xff] %vm779, %v770
  %868 = vst.msk [vmem:[%s2 + $0x2c0] sm:$0xff] %vm779, %v771
  %869 = vst.msk [vmem:[%s2 + $0x2c8] sm:$0xff] %vm779, %v772
  %870 = vst.msk [vmem:[%s2 + $0x2d0] sm:$0xff] %vm779, %v773
  %871 = vst.msk [vmem:[%s2 + $0x2d8] sm:$0xff] %vm779, %v774
  %872 = vst.msk [vmem:[%s2 + $0x2e0] sm:$0xff] %vm779, %v775
  %873 = vst.msk [vmem:[%s2 + $0x2e8] sm:$0xff] %vm779, %v776
  %874 = vst.msk [vmem:[%s2 + $0x2f0] sm:$0xff] %vm779, %v777
  %875 = vst.msk [vmem:[%s2 + $0x2f8] sm:$0xff] %vm779, %v778
  // Predicated region
  $region10: #{tpu_custom_call.1} parent=0 // pred_check
    _
  $region11: #{tpu_custom_call.1} parent=0 // pred_check_branch
    %877 = sbr.rel (0) target = $region13
  $region12: #{tpu_custom_call.1} parent=0 // pred_region
    _
  $region13: #{tpu_custom_call.1} parent=0 // pred_fallthru
    _
  // Predicated region
  $region14: #{tpu_custom_call.1} parent=0 // pred_check
    _
  $region15: #{tpu_custom_call.1} parent=0 // pred_check_branch
    %879 = sbr.rel (0) target = $region17
  $region16: #{tpu_custom_call.1} parent=0 // pred_region
    _
  $region17: #{tpu_custom_call.1} parent=0 // pred_fallthru
    _

</llo_original>
